<compile_context>
chip_gen: v6e
topology: v6e:2x2x1
jax: 0.10.0
libtpu: 0.0.40
codegen_flags: <defaults>
</compile_context>

<pallas_src>
import jax
import jax.numpy as jnp
from jax.experimental import pallas as pl
from jax.experimental.pallas import tpu as pltpu

_LANE = 128


def _round_up(x, m):
    return ((x + m - 1) // m) * m


def _vmem_budget_bytes():
    """Scoped-VMEM budget with headroom below the chip's physical capacity."""
    phys = None
    try:
        info = pltpu.get_tpu_info()
        phys = getattr(info, "vmem_capacity_bytes", None)
    except Exception:
        phys = None
    if not phys:
        phys = 64 * 2**20  # assume the smallest physical VMEM (v7x) if unknown
    # >=16 MiB headroom for compiler-internal scratch; never below 32 MiB,
    # never above 96 MiB (plenty for this kernel even on v5e/v6e).
    return int(max(32 * 2**20, min(phys - 16 * 2**20, 96 * 2**20)))


def _make_mlp_kernel(compute_dtype):
    def _mlp_kernel(x_ref, w_ref, b_ref, o_ref):
        # x_ref: (TM, H) native dtype; w_ref: (H, Lp) bf16;
        # b_ref: (1, Lp) f32;        o_ref: (TM, Lp) out dtype.
        x = x_ref[...].astype(compute_dtype)            # cast hidden under DMA
        acc = jnp.dot(x, w_ref[...], preferred_element_type=jnp.float32)
        o_ref[...] = (acc + b_ref[...]).astype(o_ref.dtype)
    return _mlp_kernel


def ner_head_logits(sequence_outputs, weight, bias, *, tm=2048,
                    compute_dtype=jnp.bfloat16, out_dtype=None):
    """sequence_outputs: (B, S, H); weight: (H, L); bias: (L,) -> (B, S, L) logits."""
    B, S, H = sequence_outputs.shape
    H_w, L = weight.shape
    assert H == H_w, "hidden size mismatch between activations and weight"
    M = B * S
    if out_dtype is None:
        out_dtype = sequence_outputs.dtype

    # Lane-dense output width: pad L up to the 128-lane vreg width so stores
    # are unmasked and writeback DMA rows are dense.
    Lp = _round_up(max(L, 1), _LANE)

    # Activations in their NATIVE dtype (no wrapper cast -> no extra HBM pass).
    x2d = sequence_outputs.reshape(M, H)
    # Weight/bias are tiny; pad their label dim with zeros so padded logits
    # columns are exactly zero (sliced off below).
    w_p = jnp.pad(weight.astype(compute_dtype), ((0, 0), (0, Lp - L)))
    b_p = jnp.pad(bias.astype(jnp.float32), (0, Lp - L)).reshape(1, Lp)

    x_bytes = jnp.dtype(x2d.dtype).itemsize
    c_bytes = jnp.dtype(compute_dtype).itemsize
    o_bytes = jnp.dtype(out_dtype).itemsize

    vmem_budget = _vmem_budget_bytes()

    # Row tile: large (HBM-roofline regime), clamped to the problem size,
    # kept a multiple of 8 for sublane alignment.
    tm_eff = max(8, min(_round_up(tm, 8), _round_up(M, 8)))
    # Keep >= 2 grid steps whenever M allows, so both v7x TensorCores get work
    # and per-core exposed grid-step overhead is halved.
    if pl.cdiv(M, tm_eff) < 2 and M > 8:
        tm_eff = max(8, _round_up(pl.cdiv(M, 2), 8))

    def _footprint(t):
        return (2 * t * H * x_bytes        # double-buffered activation tiles
                + 2 * t * Lp * o_bytes     # double-buffered output tiles
                + 2 * H * Lp * c_bytes     # weight (grid-invariant, resident)
                + 2 * Lp * 4)              # bias  (grid-invariant, resident)

    # Shrink the tile if the pipelined footprint would exceed the VMEM budget.
    while tm_eff > 8 and _footprint(tm_eff) > vmem_budget:
        tm_eff = max(8, _round_up(tm_eff // 2, 8))

    grid_m = pl.cdiv(M, tm_eff)
    vmem_limit = int(vmem_budget)

    cost = pl.CostEstimate(
        flops=2 * M * H * Lp,
        transcendentals=0,
        bytes_accessed=(M * H * x_bytes      # activations streamed once, native dtype
                        + H * Lp * c_bytes   # padded bf16 weight
                        + Lp * 4             # padded f32 bias
                        + M * Lp * o_bytes), # lane-dense logits writeback
    )

    out = pl.pallas_call(
        _make_mlp_kernel(compute_dtype),
        out_shape=jax.ShapeDtypeStruct((M, Lp), out_dtype),
        grid_spec=pltpu.PrefetchScalarGridSpec(
            num_scalar_prefetch=0,
            grid=(grid_m,),
            in_specs=[
                pl.BlockSpec((tm_eff, H), lambda i: (i, 0)),   # activation tile
                pl.BlockSpec((H, Lp), lambda i: (0, 0)),       # full weight, resident
                pl.BlockSpec((1, Lp), lambda i: (0, 0)),       # bias, resident
            ],
            out_specs=pl.BlockSpec((tm_eff, Lp), lambda i: (i, 0)),
        ),
        compiler_params=pltpu.CompilerParams(
            dimension_semantics=("parallel",),   # shards M across TCs on v7x
            vmem_limit_bytes=vmem_limit,
        ),
        cost_estimate=cost,
    )(x2d, w_p, b_p)

    # Drop the zero-padded label columns and restore (B, S, L).
    return out[:, :L].reshape(B, S, L)


def make_params(key, vocab_size, hidden, num_labels):
    """Deterministic synthetic parameters (stand-in for checkpoint weights)."""
    k_emb, k_w, k_b = jax.random.split(key, 3)
    embedding = jax.random.normal(k_emb, (vocab_size, hidden), jnp.float32) * 0.02
    # MLP(in_features=hidden, out_features=num_labels, bias=True)
    bound = 1.0 / (hidden ** 0.5)
    weight = jax.random.uniform(k_w, (hidden, num_labels), jnp.float32, -bound, bound)
    bias = jax.random.uniform(k_b, (num_labels,), jnp.float32, -bound, bound)
    return embedding, weight, bias


if __name__ == "__main__":
    batch, seq, hidden, num_labels, vocab = 2, 8, 32, 7, 100

    key = jax.random.PRNGKey(0)
    k_ids, k_params = jax.random.split(key)

    # Synthetic token ids (batch, seq) -- as in NerHead.forward(input_ids, ...)
    input_ids = jax.random.randint(k_ids, (batch, seq), 0, vocab, jnp.int32)

    embedding, weight, bias = make_params(k_params, vocab, hidden, num_labels)

    # TODO(synk): BertModel replaced by a deterministic embedding lookup.
    sequence_outputs = embedding[input_ids]            # (batch, seq, hidden)

    logits = ner_head_logits(sequence_outputs, weight, bias)
    logits = jax.block_until_ready(logits)

    assert logits.shape == (batch, seq, num_labels)
    assert logits.dtype == sequence_outputs.dtype

    # Cross-check 1: same bf16-input / f32-accumulate math done by plain JAX.
    ref_bf16 = (
        jnp.dot(
            sequence_outputs.reshape(-1, hidden).astype(jnp.bfloat16),
            weight.astype(jnp.bfloat16),
            preferred_element_type=jnp.float32,
        )
        + bias
    ).reshape(batch, seq, num_labels)
    assert jnp.allclose(logits, ref_bf16, atol=1e-3, rtol=1e-3)

    # Cross-check 2: full-f32 reference (loose tolerance for the bf16 MXU path).
    ref_f32 = sequence_outputs @ weight + bias
    assert jnp.allclose(logits, ref_f32, atol=2e-2, rtol=2e-2)

    print("KERNEL_OK")
</pallas_src>

<mosaic_0001>
module attributes {stable_mosaic.version = 11 : i64} {
  func.func @_mlp_kernel(%arg0: i32, %arg1: memref<8x32xf32, #tpu.memory_space<vmem>>, %arg2: memref<32x128xbf16, #tpu.memory_space<vmem>>, %arg3: memref<1x128xf32, #tpu.memory_space<vmem>>, %arg4: memref<8x128xf32, #tpu.memory_space<vmem>>) attributes {dimension_semantics = [#tpu.dimension_semantics<parallel>], iteration_bounds = array<i64: 2>, scalar_prefetch = 0 : i64, scratch_operands = 0 : i64, tpu.core_type = #tpu.core_type<tc>, window_params = [{transform_indices = @transform_0, window_bounds = array<i64: 8, 32>}, {pipeline_mode = #tpu.pipeline_mode<synchronous>, transform_indices = @transform_1, window_bounds = array<i64: 32, 128>}, {pipeline_mode = #tpu.pipeline_mode<synchronous>, transform_indices = @transform_2, window_bounds = array<i64: 1, 128>}, {transform_indices = @transform_3, window_bounds = array<i64: 8, 128>}]} {
    %c0 = arith.constant 0 : index
    %c0_0 = arith.constant 0 : index
    %0 = vector.load %arg1[%c0, %c0_0] : memref<8x32xf32, #tpu.memory_space<vmem>>, vector<8x32xf32>
    %1 = arith.truncf %0 : vector<8x32xf32> to vector<8x32xbf16>
    %c0_1 = arith.constant 0 : index
    %c0_2 = arith.constant 0 : index
    %2 = vector.load %arg2[%c0_1, %c0_2] : memref<32x128xbf16, #tpu.memory_space<vmem>>, vector<32x128xbf16>
    %cst = arith.constant dense<0.000000e+00> : vector<8x128xf32>
    %3 = tpu.matmul %1, %2, %cst {dimension_numbers = #tpu.dot_dimension_numbers<[1], [0], [0], [1], [0, 0, 1, 1], [], []>} : vector<8x32xbf16>, vector<32x128xbf16>, vector<8x128xf32> -> vector<8x128xf32>
    %c0_3 = arith.constant 0 : index
    %c0_4 = arith.constant 0 : index
    %4 = vector.load %arg3[%c0_3, %c0_4] : memref<1x128xf32, #tpu.memory_space<vmem>>, vector<1x128xf32>
    %5 = vector.broadcast %4 : vector<1x128xf32> to vector<8x128xf32>
    %6 = arith.addf %3, %5 : vector<8x128xf32>
    %c0_5 = arith.constant 0 : index
    %c0_6 = arith.constant 0 : index
    %7 = vector.load %arg4[%c0_5, %c0_6] : memref<8x128xf32, #tpu.memory_space<vmem>>, vector<8x128xf32>
    tpu.vector_store %arg4[%c0_5, %c0_6], %6 {strides = array<i32>} : memref<8x128xf32, #tpu.memory_space<vmem>>, vector<8x128xf32>,
    return
  }
  func.func @transform_0(%arg0: i32) -> (i32, i32) {
    %c0_i32 = arith.constant 0 : i32
    %c0_i32_0 = arith.constant 0 : i32
    return %arg0, %c0_i32 : i32, i32
  }
  func.func @transform_1(%arg0: i32) -> (i32, i32) {
    %c0_i32 = arith.constant 0 : i32
    %c0_i32_0 = arith.constant 0 : i32
    %c0_i32_1 = arith.constant 0 : i32
    return %c0_i32, %c0_i32_0 : i32, i32
  }
  func.func @transform_2(%arg0: i32) -> (i32, i32) {
    %c0_i32 = arith.constant 0 : i32
    %c0_i32_0 = arith.constant 0 : i32
    %c0_i32_1 = arith.constant 0 : i32
    return %c0_i32, %c0_i32_0 : i32, i32
  }
  func.func @transform_3(%arg0: i32) -> (i32, i32) {
    %c0_i32 = arith.constant 0 : i32
    %c0_i32_0 = arith.constant 0 : i32
    return %arg0, %c0_i32 : i32, i32
  }
}

</mosaic_0001>

<llo_original>
// kernel: tpu_custom_call.1
$region0: #{tpu_custom_call.1}
  #allocation0 [shape = 'u32[]', space=smem, size = 0x4, offset = 0x4, fixed_abs, tag = 'smem constant byte address 0x4 - core index']
  #allocation1 [shape = 'u32[144,128]{1,0:T(1,128)}', space=vmem, size = 0x12000, scoped, tag = 'internal scratch']
  %s0 = inlined_call_operand.hbm [shape: f32[16,32], index: 0, kind: input, shape index: {}]
  %s1 = inlined_call_operand.hbm [shape: bf16[32,128], index: 1, kind: input, shape index: {}]
  %s2 = inlined_call_operand.vmem [shape: f32[1,128], index: 2, kind: input, shape index: {}]
  %s3 = inlined_call_operand.hbm [shape: f32[16,128], index: 3, kind: output, shape index: {}]
  %s4 = sld [smem:[#allocation0]]
  $region53: #{tpu_custom_call.1} parent=0
    _
  %s6 = ssub.s32 1, %s4
  %s7 = scalar_select 0, %s6, %s4
  $region1: #{tpu_custom_call.1} parent=0
    #allocation2 [shape = 'u8[8192]{0}', space=vmem, size = 0x2000, scoped, tag = 'input window, operand 0']
    #allocation3 [shape = 's32[2]{0}', space=sflag, size = 0x8, scoped, tag = 'scoped memory for tpu_custom_call.1']
    #allocation4 [shape = 's32[2]{0}', space=sflag, size = 0x8, scoped, tag = 'scoped memory for tpu_custom_call.1']
    #allocation5 [shape = 'u8[8192]{0}', space=vmem, size = 0x2000, scoped, tag = 'input window, operand 1, single buffered']
    #allocation6 [shape = 's32[1]{0}', space=sflag, size = 0x4, scoped, tag = 'scoped memory for tpu_custom_call.1']
    #allocation7 [shape = 'u8[8192]{0}', space=vmem, size = 0x2000, scoped, tag = 'output window, operand 0']
    %8 = vsyncpa [#allocation3], 0
    %s9 = scalar_lea.sflag [#allocation3], 1
    %10 = vsyncpa %s9, 0
    %11 = vsyncpa [#allocation6], 0
    %12 = vsyncpa [#allocation4], 0
    %s13 = scalar_lea.sflag [#allocation4], 1
    %14 = vsyncpa %s13, 0
    loop: start=0, step=1, limit=4
    $region2: #{tpu_custom_call.1} parent=1 // loop_pre_header
      _
    $region3: #{tpu_custom_call.1} parent=1 // loop_header
      %s16 = sphi 0, %s20
      %p17 = scmp.ge.s32.totalorder %s16, 4
      %s26 = sphi 0, %s28
      %s29 = sphi 0, %s26
      %s30 = sphi 0, %s29
      %s46 = sphi 0, %s30
      %s50 = sphi 0, %s50
      %s52 = sphi 0, %s50
      %s53 = sphi 0, %s52
      %s67 = sphi 0, %s53
      %s71 = sphi 0, %s71
      %s73 = sphi 0, %s71
      %s74 = sphi 0, %s73
      %s88 = sphi 0, %s74
      %s94 = sphi 0, %s96
      %s97 = sphi 0, %s94
      %s98 = sphi 0, %s97
      %s114 = sphi 0, %s98
    $region4: #{tpu_custom_call.1} parent=1 // loop_header_branch
      %19 = sbr.rel (%p17) target = $region8
    $region5: #{tpu_custom_call.1} parent=1 // loop_body
      %s21 = ssub.s32 %s16, 1
      %s22 = ssub.s32 %s16, 2
      %s23 = sadd.s32 %s16, 1
      %s24 = ssub.s32 %s16, %s23
      %p25 = scmp.eq.s32.totalorder %s24, 0
      %s27 = sadd.s32 %s26, 1
      %s28 = scalar_select %p25, %s26, %s27
      %p31 = pneg %p25
      %p32 = scmp.eq.s32.totalorder %s16, 1
      %p33 = por %p31, %p32
      %p34 = scmp.ne.s32.totalorder %s26, %s29
      %p35 = scmp.eq.s32.totalorder %s16, 0
      %p36 = por %p34, %p35
      %p37 = scmp.ne.s32.totalorder %s26, %s29
      %p38 = scmp.eq.s32.totalorder %s21, 1
      %p39 = por %p37, %p38
      %p40 = scmp.ne.s32.totalorder %s29, %s30
      %p41 = scmp.eq.s32.totalorder %s21, 0
      %p42 = por %p40, %p41
      %p43 = scmp.ne.s32.totalorder %s29, %s30
      %p44 = scmp.eq.s32.totalorder %s22, 1
      %p45 = por %p43, %p44
      %p47 = scmp.ne.s32.totalorder %s30, %s46
      %p48 = scmp.eq.s32.totalorder %s22, 0
      %p49 = por %p47, %p48
      %s51 = sadd.s32 %s50, 1
      %p54 = scmp.eq.s32.totalorder %s16, 1
      %p55 = scmp.ne.s32.totalorder %s50, %s52
      %p56 = scmp.eq.s32.totalorder %s16, 0
      %p57 = por %p55, %p56
      %p58 = scmp.ne.s32.totalorder %s50, %s52
      %p59 = scmp.eq.s32.totalorder %s21, 1
      %p60 = por %p58, %p59
      %p61 = scmp.ne.s32.totalorder %s52, %s53
      %p62 = scmp.eq.s32.totalorder %s21, 0
      %p63 = por %p61, %p62
      %p64 = scmp.ne.s32.totalorder %s52, %s53
      %p65 = scmp.eq.s32.totalorder %s22, 1
      %p66 = por %p64, %p65
      %p68 = scmp.ne.s32.totalorder %s53, %s67
      %p69 = scmp.eq.s32.totalorder %s22, 0
      %p70 = por %p68, %p69
      %s72 = sadd.s32 %s71, 1
      %p75 = scmp.eq.s32.totalorder %s16, 1
      %p76 = scmp.ne.s32.totalorder %s71, %s73
      %p77 = scmp.eq.s32.totalorder %s16, 0
      %p78 = por %p76, %p77
      %p79 = scmp.ne.s32.totalorder %s71, %s73
      %p80 = scmp.eq.s32.totalorder %s21, 1
      %p81 = por %p79, %p80
      %p82 = scmp.ne.s32.totalorder %s73, %s74
      %p83 = scmp.eq.s32.totalorder %s21, 0
      %p84 = por %p82, %p83
      %p85 = scmp.ne.s32.totalorder %s73, %s74
      %p86 = scmp.eq.s32.totalorder %s22, 1
      %p87 = por %p85, %p86
      %p89 = scmp.ne.s32.totalorder %s74, %s88
      %p90 = scmp.eq.s32.totalorder %s22, 0
      %p91 = por %p89, %p90
      %s92 = ssub.s32 %s16, %s23
      %p93 = scmp.eq.s32.totalorder %s92, 0
      %s95 = sadd.s32 %s94, 1
      %s96 = scalar_select %p93, %s94, %s95
      %p99 = pneg %p93
      %p100 = scmp.eq.s32.totalorder %s16, 1
      %p101 = por %p99, %p100
      %p102 = scmp.ne.s32.totalorder %s94, %s97
      %p103 = scmp.eq.s32.totalorder %s16, 0
      %p104 = por %p102, %p103
      %p105 = scmp.ne.s32.totalorder %s94, %s97
      %p106 = scmp.eq.s32.totalorder %s21, 1
      %p107 = por %p105, %p106
      %p108 = scmp.ne.s32.totalorder %s97, %s98
      %p109 = scmp.eq.s32.totalorder %s21, 0
      %p110 = por %p108, %p109
      %p111 = scmp.ne.s32.totalorder %s97, %s98
      %p112 = scmp.eq.s32.totalorder %s22, 1
      %p113 = por %p111, %p112
      %p115 = scmp.ne.s32.totalorder %s98, %s114
      %p116 = scmp.eq.s32.totalorder %s22, 0
      %p117 = por %p115, %p116
      %p118 = scmp.le.s32.totalorder 1, %s16
      %p119 = scmp.lt.s32.totalorder %s16, 3
      %p120 = pnand %p118, %p119
      %p121 = pneg %p120
      // Predicated region
      $region9: #{tpu_custom_call.1} parent=5 // pred_check
        _
      $region10: #{tpu_custom_call.1} parent=5 // pred_check_branch
        %123 = sbr.rel (%p120) target = $region12
      $region11: #{tpu_custom_call.1} parent=5 // pred_region
        %s124 = ssub.s32 %s16, 1
        // Predicated region
        $region13: #{tpu_custom_call.1} parent=11 // pred_check
          %p125 = pneg %p63
        $region14: #{tpu_custom_call.1} parent=11 // pred_check_branch
          %127 = sbr.rel (%p125) target = $region16
        $region15: #{tpu_custom_call.1} parent=11 // pred_region
          %s129 = ssub.s32 256, 256
          %130 = vsyncadd [#allocation6], %s129
          %s131 = sshll.u32 [#allocation5], 4
          %s132 = int_to_ptr.vmem [resolvable:$true] %s131
          %137 = dma.hbm_to_vmem [thread:$0]  %s1, 256, %s132, [#allocation6], 64, 64, 4
        $region16: #{tpu_custom_call.1} parent=11 // pred_fallthru
          _
        // Predicated region
        $region17: #{tpu_custom_call.1} parent=11 // pred_check
          %p138 = pneg %p84
        $region18: #{tpu_custom_call.1} parent=11 // pred_check_branch
          %140 = sbr.rel (%p138) target = $region20
        $region19: #{tpu_custom_call.1} parent=11 // pred_region
          _
        $region20: #{tpu_custom_call.1} parent=11 // pred_fallthru
          _
      $region12: #{tpu_custom_call.1} parent=5 // pred_fallthru
        _
      %p141 = scmp.lt.s32.totalorder %s16, 2
      // Predicated region
      $region21: #{tpu_custom_call.1} parent=5 // pred_check
        %p142 = pneg %p141
      $region22: #{tpu_custom_call.1} parent=5 // pred_check_branch
        %144 = sbr.rel (%p142) target = $region24
      $region23: #{tpu_custom_call.1} parent=5 // pred_region
        // Predicated region
        $region25: #{tpu_custom_call.1} parent=23 // pred_check
          %p145 = pneg %p36
        $region26: #{tpu_custom_call.1} parent=23 // pred_check_branch
          %147 = sbr.rel (%p145) target = $region28
        $region27: #{tpu_custom_call.1} parent=23 // pred_region
          %s148 = sand.u32 %s26, 1
          %s149 = scalar_lea.sflag [#allocation3], %s148
          %s150 = sand.u32 %s26, 1
          %s151 = smul.addr %s150, 8
          %s152 = scalar_lea.vmem [#allocation2], %s151
          %s154 = ssub.s32 128, 128
          %155 = vsyncadd %s149, %s154
          %s156 = smul.addr %s16, 128
          %s157 = scalar_lea.hbm %s0, %s156
          %s159 = sshll.u32 %s152, 4
          %s160 = int_to_ptr.vmem [resolvable:$true] %s159
          %162 = dma.hbm_to_vmem [thread:$0]  %s157, 128, %s160, %s149
        $region28: #{tpu_custom_call.1} parent=23 // pred_fallthru
          _
      $region24: #{tpu_custom_call.1} parent=5 // pred_fallthru
        _
      %p163 = scmp.le.s32.totalorder 1, %s16
      %p164 = scmp.lt.s32.totalorder %s16, 3
      %p165 = pnand %p163, %p164
      %p166 = pneg %p165
      // Predicated region
      $region29: #{tpu_custom_call.1} parent=5 // pred_check
        _
      $region30: #{tpu_custom_call.1} parent=5 // pred_check_branch
        %168 = sbr.rel (%p165) target = $region32
      $region31: #{tpu_custom_call.1} parent=5 // pred_region
        %s169 = ssub.s32 %s16, 1
        %s170 = sand.u32 %s29, 1
        %s171 = scalar_lea.sflag [#allocation3], %s170
        %s172 = sand.u32 %s29, 1
        %s173 = smul.addr %s172, 8
        %s174 = scalar_lea.vmem [#allocation2], %s173
        // Predicated region
        $region33: #{tpu_custom_call.1} parent=31 // pred_check
          %p175 = pneg %p42
        $region34: #{tpu_custom_call.1} parent=31 // pred_check_branch
          %177 = sbr.rel (%p175) target = $region36
        $region35: #{tpu_custom_call.1} parent=31 // pred_region
          %178 = dma.done %s171, 128
        $region36: #{tpu_custom_call.1} parent=31 // pred_fallthru
          _
        // Predicated region
        $region37: #{tpu_custom_call.1} parent=31 // pred_check
          %p179 = pneg %p63
        $region38: #{tpu_custom_call.1} parent=31 // pred_check_branch
          %181 = sbr.rel (%p179) target = $region40
        $region39: #{tpu_custom_call.1} parent=31 // pred_region
          %182 = dma.done [#allocation6], 256
        $region40: #{tpu_custom_call.1} parent=31 // pred_fallthru
          _
        %s183 = sand.u32 %s29, 1
        %s184 = scalar_lea.sflag [#allocation3], %s183
        %s185 = sand.u32 %s29, 1
        %s186 = smul.addr %s185, 8
        %s187 = scalar_lea.vmem [#allocation2], %s186
        %p188 = pneg %p42
        %p189 = pneg %p39
        %p190 = pneg %p63
        %p191 = pneg %p60
        %p192 = pneg %p84
        %p193 = pneg %p81
        %p194 = pneg %p110
        %p195 = pneg %p107
        %s196 = sand.u32 %s97, 1
        %s197 = scalar_lea.sflag [#allocation4], %s196
        %s198 = sand.u32 %s97, 1
        %s199 = smul.addr %s198, 8
        %s200 = scalar_lea.vmem [#allocation7], %s199
        %v202 = vld [vmem:[%s174] sm:$0xff]
        %v203 = vpack.c.bf16 %v202, %v202
        %v204 = vld [vmem:[#allocation5] sm:$0xf]
        %v205 = vld [vmem:[#allocation5 + $0x4] sm:$0xf]
        %v206 = vld [vmem:[#allocation5 + $0x8] sm:$0xf]
        %v207 = vld [vmem:[#allocation5 + $0xc] sm:$0xf]
        %v208 = vld [vmem:[%s2] sm:$0x1]
        %v210 = vlaneseq
        %v211 = vshrl.u32 %v210, 7
        %v212 = vsub.s32 0, %v211
        %v213 = vrot.slane %v208, %v212
        %v219 = vunpack.c.l.b16 %v204
        %v220 = vunpack.c.l.b16 %v205
        %v221 = vunpack.c.l.b16 %v206
        %v222 = vunpack.c.l.b16 %v207
        %v223 = vpack.c.b16 %v220, %v219
        %v224 = vpack.c.b16 %v222, %v221
        %vm227 = vcmask 261120
        %v229 = vsel %vm227, %v203, 0
        %231 = vmatprep.subr.bf16.mxu0 0
        %232 = vmatpush1.bf16.msra.mxu0 0
        %233 = vmatprep.subr.bf16.mxu0 0
        %234 = vmatpush1.bf16.msra.mxu0 0
        %235 = vmatprep.subr.bf16.mxu0 0
        %236 = vmatpush1.bf16.msra.mxu0 0
        %237 = vmatprep.subr.bf16.mxu0 0
        %238 = vmatpush1.bf16.msra.mxu0 0
        %239 = vmatprep.subr.bf16.mxu0 0
        %240 = vmatpush1.bf16.msra.mxu0 0
        %241 = vmatprep.subr.bf16.mxu0 0
        %242 = vmatpush1.bf16.msra.mxu0 0
        %243 = vmatprep.subr.bf16.mxu0 0
        %244 = vmatpush1.bf16.msra.mxu0 %v224
        %245 = vmatprep.subr.bf16.mxu0 0
        %246 = vmatpush1.bf16.msra.mxu0 %v223
        %247 = vmatprep.subr.bf16.mxu0 0
        %248 = vmatpush2.bf16.msra.mxu0 0
        %249 = vmatprep.subr.bf16.mxu0 0
        %250 = vmatpush2.bf16.msra.mxu0 0
        %251 = vmatprep.subr.bf16.mxu0 0
        %252 = vmatpush2.bf16.msra.mxu0 0
        %253 = vmatprep.subr.bf16.mxu0 0
        %254 = vmatpush2.bf16.msra.mxu0 0
        %255 = vmatprep.subr.bf16.mxu0 0
        %256 = vmatpush2.bf16.msra.mxu0 0
        %257 = vmatprep.subr.bf16.mxu0 0
        %258 = vmatpush2.bf16.msra.mxu0 0
        %259 = vmatprep.subr.bf16.mxu0 0
        %260 = vmatpush2.bf16.msra.mxu0 0
        %261 = vmatprep.subr.bf16.mxu0 0
        %262 = vmatpush2.bf16.msra.mxu0 0
        %263 = vmatprep.mubr.bf16.mxu0 0
        %264 = vmatmul.mubr.bf16.gmra.mxu0 %v229
        %v265 = vpop.f32.mrf.mxu0
        %v266 = vadd.f32 %v213, %v265
        %v267 = vpop.f32.mrf.mxu0
        %v268 = vpop.f32.mrf.mxu0
        %v269 = vpop.f32.mrf.mxu0
        %270 = vdwg.mxu0
        %271 = vst [vmem:[%s200] sm:$0xff] %v266
        %s272 = sand.u32 %s97, 1
        %s273 = scalar_lea.sflag [#allocation4], %s272
        %s274 = sand.u32 %s97, 1
        %s275 = smul.addr %s274, 8
        %s276 = scalar_lea.vmem [#allocation7], %s275
        // Predicated region
        $region41: #{tpu_custom_call.1} parent=31 // pred_check
          %p277 = pneg %p107
        $region42: #{tpu_custom_call.1} parent=31 // pred_check_branch
          %279 = sbr.rel (%p277) target = $region44
        $region43: #{tpu_custom_call.1} parent=31 // pred_region
          %s281 = ssub.s32 128, 128
          %282 = vsyncadd %s273, %s281
          %s283 = smul.addr %s21, 128
          %s284 = scalar_lea.hbm %s3, %s283
          %s286 = sshll.u32 %s276, 4
          %s287 = int_to_ptr.vmem [resolvable:$true] %s286
          %289 = dma.vmem_to_hbm [thread:$0]  %s287, 128, %s284, %s273
        $region44: #{tpu_custom_call.1} parent=31 // pred_fallthru
          _
      $region32: #{tpu_custom_call.1} parent=5 // pred_fallthru
        _
      %p290 = scmp.le.s32.totalorder 2, %s16
      // Predicated region
      $region45: #{tpu_custom_call.1} parent=5 // pred_check
        %p291 = pneg %p290
      $region46: #{tpu_custom_call.1} parent=5 // pred_check_branch
        %293 = sbr.rel (%p291) target = $region48
      $region47: #{tpu_custom_call.1} parent=5 // pred_region
        %s294 = ssub.s32 %s16, 2
        // Predicated region
        $region49: #{tpu_custom_call.1} parent=47 // pred_check
          %p295 = pneg %p113
        $region50: #{tpu_custom_call.1} parent=47 // pred_check_branch
          %297 = sbr.rel (%p295) target = $region52
        $region51: #{tpu_custom_call.1} parent=47 // pred_region
          %s298 = sand.u32 %s98, 1
          %s299 = scalar_lea.sflag [#allocation4], %s298
          %s300 = sand.u32 %s98, 1
          %s301 = smul.addr %s300, 8
          %s302 = scalar_lea.vmem [#allocation7], %s301
          %303 = dma.done %s299, 128
        $region52: #{tpu_custom_call.1} parent=47 // pred_fallthru
          _
      $region48: #{tpu_custom_call.1} parent=5 // pred_fallthru
        _
    $region6: #{tpu_custom_call.1} parent=1 // loop_footer
      %s20 = sadd.s32 1, %s16
    $region7: #{tpu_custom_call.1} parent=1 // loop_footer_branch
      %15 = sbr.rel target = $region3
    $region8: #{tpu_custom_call.1} parent=1 // loop_exit
      _
    %304 = vsyncpa [#allocation3], 1
    %s305 = scalar_lea.sflag [#allocation3], 1
    %306 = vsyncpa %s305, 1
    %307 = vsyncpa [#allocation6], 1
    %308 = vsyncpa [#allocation4], 1
    %s309 = scalar_lea.sflag [#allocation4], 1
    %310 = vsyncpa %s309, 1

</llo_original>
